<compile_context>
chip_gen: v7x
topology: tpu7x:2x2x1
jax: 0.10.0
libtpu: 0.0.40
codegen_flags: <defaults>
</compile_context>

<pallas_src>
import jax
import jax.numpy as jnp
from jax.experimental import pallas as pl
from jax.experimental.pallas import tpu as pltpu


def _round_up(n, m):
    return ((n + m - 1) // m) * m


def _cdiv(a, b):
    return (a + b - 1) // b


# ---------------------------------------------------------------------------
# Kernels
# ---------------------------------------------------------------------------

def _row_kernel(x_ref, w_ref, b_ref, out_ref):
    """Small/medium in_features: lane-dense result row.

    x_ref  : (tb, F)  tile of x in its native (batch-major) layout
    w_ref  : (F, 1)   weight column, VMEM-resident across the whole grid
    b_ref  : (1,)     bias scalar in SMEM
    out_ref: (2, tb)  row 0 = logits, row 1 = probabilities (batch on lanes)
    """
    # Cast right after load (bf16 input path), then relayout so features live
    # on sublanes and batch on lanes.  The VPU multiply + sublane reduction
    # then yields a dense (1, tb) row -> unmasked lane-dense stores.
    xt = x_ref[...].astype(jnp.float32).T          # (F, tb)
    w = w_ref[...]                                  # (F, 1), broadcast on lanes
    b = b_ref[0]

    z = jnp.sum(xt * w, axis=0, keepdims=True) + b  # (1, tb), f32
    logits = jnp.maximum(z, 0.0)                    # ReLU
    probs = 1.0 / (1.0 + jnp.exp(-logits))          # exact sigmoid (EUP exp)

    out_ref[0:1, :] = logits.astype(out_ref.dtype)
    out_ref[1:2, :] = probs.astype(out_ref.dtype)


def _col_kernel(x_ref, w_ref, b_ref, out_ref):
    """Large in_features: MXU dot in native layout; column result.

    x_ref  : (tb, F)  tile of x (tb is small here, F is huge)
    w_ref  : (F, 1)   weight column, VMEM-resident
    b_ref  : (1,)     bias scalar in SMEM
    out_ref: (tb, 2)  col 0 = logits, col 1 = probabilities
    """
    x = x_ref[...].astype(jnp.float32)
    w = w_ref[...]
    b = b_ref[0]

    z = jnp.dot(x, w, preferred_element_type=jnp.float32) + b   # (tb, 1)
    logits = jnp.maximum(z, 0.0)
    probs = 1.0 / (1.0 + jnp.exp(-logits))

    out_ref[:, 0:1] = logits.astype(out_ref.dtype)
    out_ref[:, 1:2] = probs.astype(out_ref.dtype)


# ---------------------------------------------------------------------------
# Tile planning
# ---------------------------------------------------------------------------

def _plan(B, F, itemsize, block_batch):
    """Pick (row_path, tb, grid, vmem_limit) from static shapes."""
    MIB = 1 << 20
    lanes = _round_up(F, 128)          # lane-padded minor dim of the x tile
    row_path = F <= 2048

    if row_path:
        # x double-buffered + loaded value + f32 transpose + f32 product.
        per_tb = 3 * lanes * itemsize + 3 * _round_up(F, 8) * 4 + 256
    else:
        # x double-buffered + loaded value + a few lane-padded f32 columns.
        per_tb = 3 * lanes * itemsize + 4096

    budget = 32 * MIB
    if block_batch is not None:
        # Validate explicit tile: multiple of 8, never over-padding the batch.
        tb = max(8, (int(block_batch) // 8) * 8)
    else:
        tb = max(8, budget // per_tb)
        tb = min(tb, 32768)
        tb = (tb // 128) * 128 if tb >= 128 else (tb // 8) * 8
        # Keep >= ~4 grid steps when the batch is large enough so the
        # "parallel" axis can actually be sharded across v7x's two TCs.
        tb = min(tb, max(128, _round_up(_cdiv(B, 4), 128)))

    tb = max(8, min(tb, _round_up(B, 8)))   # never over-pad the batch
    grid_b = _cdiv(B, tb)                   # ragged last block is allowed

    vmem_limit = int(min(48 * MIB, max(32 * MIB, tb * per_tb + 8 * MIB)))
    return row_path, tb, grid_b, vmem_limit


# ---------------------------------------------------------------------------
# Wrapper
# ---------------------------------------------------------------------------

def model_forward(x, weight, bias, *, block_batch=None):
    """x: (B, F) f32 or bf16; weight: (1, F) (PyTorch Linear layout); bias: (1,).

    Returns (logits, probabilities), each (B, 1) f32.
    """
    B, F = x.shape
    if x.dtype not in (jnp.float32, jnp.bfloat16):
        x = x.astype(jnp.float32)
    itemsize = x.dtype.itemsize

    w_col = weight.astype(jnp.float32).reshape(F, 1)   # tiny, VMEM-resident
    b = bias.astype(jnp.float32).reshape(1)            # SMEM scalar

    row_path, tb, grid_b, vmem_limit = _plan(B, F, itemsize, block_batch)

    if row_path:
        kernel = _row_kernel
        out_shape = jax.ShapeDtypeStruct((grid_b, 2, tb), jnp.float32)
        out_spec = pl.BlockSpec((None, 2, tb), lambda i: (i, 0, 0))
    else:
        kernel = _col_kernel
        out_shape = jax.ShapeDtypeStruct((grid_b, tb, 2), jnp.float32)
        out_spec = pl.BlockSpec((None, tb, 2), lambda i: (i, 0, 0))

    out = pl.pallas_call(
        kernel,
        out_shape=out_shape,
        grid=(grid_b,),
        in_specs=[
            pl.BlockSpec((tb, F), lambda i: (i, 0)),             # x, native layout
            pl.BlockSpec((F, 1), lambda i: (0, 0)),              # weight (resident)
            pl.BlockSpec(memory_space=pltpu.MemorySpace.SMEM),   # bias scalar
        ],
        out_specs=out_spec,
        compiler_params=pltpu.CompilerParams(
            dimension_semantics=("parallel",),
            vmem_limit_bytes=vmem_limit,
        ),
    )(x, w_col, b)

    # Output is only 2*B*4 bytes -> wrapper-side un-scrambling is free.
    # Rows past B (ragged last block) hold garbage and are sliced off; they
    # never feed any cross-batch reduction.
    if row_path:
        rows = jnp.transpose(out, (1, 0, 2)).reshape(2, grid_b * tb)
        logits = rows[0, :B].reshape(B, 1)
        probs = rows[1, :B].reshape(B, 1)
    else:
        flat = out.reshape(grid_b * tb, 2)
        logits = flat[:B, 0:1]
        probs = flat[:B, 1:2]
    return logits, probs


if __name__ == "__main__":
    in_features = 32
    batch = 8

    key = jax.random.PRNGKey(0)
    kx, kw, kb = jax.random.split(key, 3)

    # Deterministic synthetic parameters (PyTorch Linear(in_features, 1) shapes).
    x = jax.random.normal(kx, (batch, in_features), dtype=jnp.float32)
    bound = 1.0 / (in_features ** 0.5)
    weight = jax.random.uniform(kw, (1, in_features), minval=-bound, maxval=bound,
                                dtype=jnp.float32)
    bias = jax.random.uniform(kb, (1,), minval=-bound, maxval=bound,
                              dtype=jnp.float32)

    logits, probs = model_forward(x, weight, bias)
    jax.block_until_ready((logits, probs))

    # Reference check (plain JAX).
    ref_logits = jnp.maximum(x @ weight.T + bias, 0.0)
    ref_probs = jax.nn.sigmoid(ref_logits)
    assert logits.shape == (batch, 1) and probs.shape == (batch, 1)
    assert jnp.allclose(logits, ref_logits, atol=1e-5), "logits mismatch"
    assert jnp.allclose(probs, ref_probs, atol=1e-5), "probs mismatch"

    print("KERNEL_OK")
</pallas_src>

<mosaic_0001>
module attributes {stable_mosaic.version = 11 : i64} {
  func.func @_row_kernel(%arg0: i32, %arg1: memref<8x32xf32, #tpu.memory_space<vmem>>, %arg2: memref<32x1xf32, #tpu.memory_space<vmem>>, %arg3: memref<1xf32, #tpu.memory_space<smem>>, %arg4: memref<1x2x8xf32, #tpu.memory_space<vmem>>) attributes {dimension_semantics = [#tpu.dimension_semantics<parallel>], iteration_bounds = array<i64: 1>, scalar_prefetch = 0 : i64, scratch_operands = 0 : i64, tpu.core_type = #tpu.core_type<tc>, window_params = [{transform_indices = @transform_0, window_bounds = array<i64: 8, 32>}, {pipeline_mode = #tpu.pipeline_mode<synchronous>, transform_indices = @transform_1, window_bounds = array<i64: 32, 1>}, {transform_indices = @transform_2, window_bounds = array<i64: 1>}, {transform_indices = @transform_3, window_bounds = array<i64: 1, 2, 8>}]} {
    %c0 = arith.constant 0 : index
    %c0_0 = arith.constant 0 : index
    %0 = vector.load %arg1[%c0, %c0_0] : memref<8x32xf32, #tpu.memory_space<vmem>>, vector<8x32xf32>
    %1 = tpu.transpose %0, [1, 0] : vector<8x32xf32> -> vector<32x8xf32>
    %c0_1 = arith.constant 0 : index
    %c0_2 = arith.constant 0 : index
    %2 = vector.load %arg2[%c0_1, %c0_2] : memref<32x1xf32, #tpu.memory_space<vmem>>, vector<32x1xf32>
    %c0_3 = arith.constant 0 : index
    %3 = memref.load %arg3[%c0_3] : memref<1xf32, #tpu.memory_space<smem>>
    %4 = vector.broadcast %2 : vector<32x1xf32> to vector<32x8xf32>
    %5 = arith.mulf %1, %4 : vector<32x8xf32>
    %cst = arith.constant dense<0.000000e+00> : vector<8xf32>
    %6 = vector.multi_reduction <add>, %5, %cst [0] : vector<32x8xf32> to vector<8xf32>
    %7 = vector.shape_cast %6 : vector<8xf32> to vector<1x8xf32>
    %8 = vector.broadcast %3 : f32 to vector<1x8xf32>
    %9 = arith.addf %7, %8 : vector<1x8xf32>
    %cst_4 = arith.constant 0.000000e+00 : f32
    %10 = vector.broadcast %cst_4 : f32 to vector<1x8xf32>
    %11 = arith.maximumf %9, %10 : vector<1x8xf32>
    %cst_5 = arith.constant 0.000000e+00 : f32
    %12 = vector.broadcast %cst_5 : f32 to vector<1x8xf32>
    %13 = arith.subf %12, %11 : vector<1x8xf32>
    %14 = math.exp %13 : vector<1x8xf32>
    %cst_6 = arith.constant 1.000000e+00 : f32
    %15 = vector.broadcast %cst_6 : f32 to vector<1x8xf32>
    %16 = arith.addf %15, %14 : vector<1x8xf32>
    %cst_7 = arith.constant 1.000000e+00 : f32
    %17 = vector.broadcast %cst_7 : f32 to vector<1x8xf32>
    %18 = arith.divf %17, %16 : vector<1x8xf32>
    %c0_8 = arith.constant 0 : index
    %c0_9 = arith.constant 0 : index
    %c0_10 = arith.constant 0 : index
    %19 = vector.load %arg4[%c0_8, %c0_9, %c0_10] : memref<1x2x8xf32, #tpu.memory_space<vmem>>, vector<1x1x8xf32>
    %20 = vector.shape_cast %19 : vector<1x1x8xf32> to vector<1x8xf32>
    %21 = vector.shape_cast %11 : vector<1x8xf32> to vector<1x1x8xf32>
    tpu.vector_store %arg4[%c0_8, %c0_9, %c0_10], %21 {strides = array<i32>} : memref<1x2x8xf32, #tpu.memory_space<vmem>>, vector<1x1x8xf32>,
    %c0_11 = arith.constant 0 : index
    %c1 = arith.constant 1 : index
    %c0_12 = arith.constant 0 : index
    %22 = vector.load %arg4[%c0_11, %c1, %c0_12] : memref<1x2x8xf32, #tpu.memory_space<vmem>>, vector<1x1x8xf32>
    %23 = vector.shape_cast %22 : vector<1x1x8xf32> to vector<1x8xf32>
    %24 = vector.shape_cast %18 : vector<1x8xf32> to vector<1x1x8xf32>
    tpu.vector_store %arg4[%c0_11, %c1, %c0_12], %24 {strides = array<i32>} : memref<1x2x8xf32, #tpu.memory_space<vmem>>, vector<1x1x8xf32>,
    return
  }
  func.func @transform_0(%arg0: i32) -> (i32, i32) {
    %c0_i32 = arith.constant 0 : i32
    %c0_i32_0 = arith.constant 0 : i32
    return %arg0, %c0_i32 : i32, i32
  }
  func.func @transform_1(%arg0: i32) -> (i32, i32) {
    %c0_i32 = arith.constant 0 : i32
    %c0_i32_0 = arith.constant 0 : i32
    %c0_i32_1 = arith.constant 0 : i32
    return %c0_i32, %c0_i32_0 : i32, i32
  }
  func.func @transform_2(%arg0: i32) -> i32 {
    %c0_i32 = arith.constant 0 : i32
    %c0_i32_0 = arith.constant 0 : i32
    return %c0_i32 : i32
  }
  func.func @transform_3(%arg0: i32) -> (i32, i32, i32) {
    %c0_i32 = arith.constant 0 : i32
    %c0_i32_0 = arith.constant 0 : i32
    %c0_i32_1 = arith.constant 0 : i32
    return %arg0, %c0_i32, %c0_i32_0 : i32, i32, i32
  }
}

</mosaic_0001>

<llo_original>
// kernel: tpu_custom_call.1
$region0: #{tpu_custom_call.1}
  #allocation0 [shape = 'u32[]', space=smem, size = 0x4, offset = 0x4, fixed_abs, tag = 'smem constant byte address 0x4 - core index']
  #allocation1 [shape = 'u32[144,128]{1,0:T(1,128)}', space=vmem, size = 0x12000, scoped, tag = 'internal scratch']
  #allocation2 [shape = 'f32[1]{0:T(128)S(6)}', space=smem, size = 0x200, scoped, tag = 'scoped memory for tpu_custom_call.1']
  %s0 = inlined_call_operand.vmem [shape: f32[8,32], index: 0, kind: input, shape index: {}]
  %s1 = inlined_call_operand.vmem [shape: f32[32,1], index: 1, kind: input, shape index: {}]
  %s2 = inlined_call_operand.<no memory space> [shape: f32[1], index: 2, kind: input, shape index: {}]
  %s3 = inlined_call_operand.hbm [shape: f32[1,2,8], index: 3, kind: output, shape index: {}]
  %s4 = sld [smem:[#allocation0]]
  $region22: #{tpu_custom_call.1} parent=0
    _
  %s6 = ssub.s32 1, %s4
  %s7 = scalar_select 0, %s6, %s4
  %8 = sst [smem:[#allocation2]] %s2
  $region1: #{tpu_custom_call.1} parent=0
    #allocation3 [shape = 'u8[1024]{0}', space=vmem, size = 0x400, scoped, tag = 'output window, operand 0, single buffered']
    #allocation4 [shape = 's32[1]{0}', space=sflag, size = 0x4, scoped, tag = 'scoped memory for tpu_custom_call.1']
    %9 = vsyncpa [#allocation4], 0
    // Predicated region
    $region2: #{tpu_custom_call.1} parent=1 // pred_check
      _
    $region3: #{tpu_custom_call.1} parent=1 // pred_check_branch
      %11 = sbr.rel (0) target = $region5
    $region4: #{tpu_custom_call.1} parent=1 // pred_region
      _
    $region5: #{tpu_custom_call.1} parent=1 // pred_fallthru
      _
    // Predicated region
    $region6: #{tpu_custom_call.1} parent=1 // pred_check
      _
    $region7: #{tpu_custom_call.1} parent=1 // pred_check_branch
      %13 = sbr.rel (0) target = $region9
    $region8: #{tpu_custom_call.1} parent=1 // pred_region
      _
    $region9: #{tpu_custom_call.1} parent=1 // pred_fallthru
      _
    // Predicated region
    $region10: #{tpu_custom_call.1} parent=1 // pred_check
      _
    $region11: #{tpu_custom_call.1} parent=1 // pred_check_branch
      %15 = sbr.rel (0) target = $region13
    $region12: #{tpu_custom_call.1} parent=1 // pred_region
      _
    $region13: #{tpu_custom_call.1} parent=1 // pred_fallthru
      _
    %v16 = vld [vmem:[%s0] sm:$0xff]
    %17 = vxpose.xlu0.b32.start [1/16] %v16, 128
    %18 = vxpose.xlu0.b32.cont [2/16] 0.0, 128
    %19 = vxpose.xlu0.b32.cont [3/16] 0.0, 128
    %20 = vxpose.xlu0.b32.cont [4/16] 0.0, 128
    %21 = vxpose.xlu0.b32.cont [5/16] 0.0, 128
    %22 = vxpose.xlu0.b32.cont [6/16] 0.0, 128
    %23 = vxpose.xlu0.b32.cont [7/16] 0.0, 128
    %24 = vxpose.xlu0.b32.cont [8/16] 0.0, 128
    %25 = vxpose.xlu0.b32.cont [9/16] 0.0, 128
    %26 = vxpose.xlu0.b32.cont [10/16] 0.0, 128
    %27 = vxpose.xlu0.b32.cont [11/16] 0.0, 128
    %28 = vxpose.xlu0.b32.cont [12/16] 0.0, 128
    %29 = vxpose.xlu0.b32.cont [13/16] 0.0, 128
    %30 = vxpose.xlu0.b32.cont [14/16] 0.0, 128
    %31 = vxpose.xlu0.b32.cont [15/16] 0.0, 128
    %32 = vxpose.xlu0.b32.end [16/16] 0.0, 128
    %v33 = vpop.trf.xlu0
    %v34 = vpop.trf.xlu0
    %v35 = vpop.trf.xlu0
    %v36 = vpop.trf.xlu0
    %v37 = vpop.trf.xlu0
    %v38 = vpop.trf.xlu0
    %v39 = vpop.trf.xlu0
    %v40 = vpop.trf.xlu0
    %v41 = vpop.trf.xlu0
    %v42 = vpop.trf.xlu0
    %v43 = vpop.trf.xlu0
    %v44 = vpop.trf.xlu0
    %v45 = vpop.trf.xlu0
    %v46 = vpop.trf.xlu0
    %v47 = vpop.trf.xlu0
    %v48 = vpop.trf.xlu0
    %v49 = vld [vmem:[%s1] sm:$0xff]
    %v50 = vld [vmem:[%s1 + $0x8] sm:$0xff]
    %v51 = vld [vmem:[%s1 + $0x10] sm:$0xff]
    %v52 = vld [vmem:[%s1 + $0x18] sm:$0xff]
    %s53 = sld [smem:[#allocation2]]
    %55 = vset.pattern.permute.xlu0 0
    %56 = vperm.xlu0 %55, %v49
    %v57 = vpop.permute.xlu0 %56
    %60 = vset.pattern.permute.xlu0 0
    %61 = vperm.xlu0 %60, %v50
    %v62 = vpop.permute.xlu0 %61
    %65 = vset.pattern.permute.xlu0 0
    %66 = vperm.xlu0 %65, %v51
    %v67 = vpop.permute.xlu0 %66
    %70 = vset.pattern.permute.xlu0 0
    %71 = vperm.xlu0 %70, %v52
    %v72 = vpop.permute.xlu0 %71
    %v74 = vmul.f32 %v33, %v57
    %v75 = vmul.f32 %v34, %v62
    %v76 = vmul.f32 %v35, %v67
    %v77 = vmul.f32 %v36, %v72
    %vm78 = vcmask 64512
    %v79 = vsel %vm78, %v74, 0.0
    %v80 = vsel %vm78, %v75, 0.0
    %v81 = vadd.f32 %v79, %v80
    %v82 = vsel %vm78, %v76, 0.0
    %v83 = vadd.f32 %v81, %v82
    %v84 = vsel %vm78, %v77, 0.0
    %v85 = vadd.f32 %v83, %v84
    %v86 = vrot.slane %v85, 4
    %v87 = vadd.f32 %v85, %v86
    %v88 = vrot.slane %v87, 2
    %v89 = vadd.f32 %v87, %v88
    %v90 = vrot.slane %v89, 1
    %v91 = vadd.f32 %v89, %v90
    %v92 = vstv %s53
    %v93 = vadd.f32 %v91, %v92
    %v94 = vmax.f32 %v93, 0.0
    %v95 = vsub.f32 0.0, %v94
    %v96 = vmul.f32 %v95, 1.442695
    %v97 = vpow.pop %v96
    %v98 = vadd.f32 %v97, 1.0
    %v99 = vrcp.pop %v98
    %v100 = vmul.f32 1.0, %v99
    %vm101 = vcmask 57344
    %102 = vst.msk [vmem:[#allocation3] sm:$0x1] %vm101, %v94
    %103 = vst.msk [vmem:[#allocation3 + $0x1] sm:$0x1] %vm101, %v100
    // Predicated region
    $region14: #{tpu_custom_call.1} parent=1 // pred_check
      _
    $region15: #{tpu_custom_call.1} parent=1 // pred_check_branch
      %105 = sbr.rel (0) target = $region17
    $region16: #{tpu_custom_call.1} parent=1 // pred_region
      %s107 = ssub.s32 32, 32
      %108 = vsyncadd [#allocation4], %s107
      %s110 = sshll.u32 [#allocation3], 4
      %s111 = int_to_ptr.vmem [resolvable:$true] %s110
      %113 = dma.vmem_to_hbm [thread:$0]  %s111, 32, %s3, [#allocation4]
    $region17: #{tpu_custom_call.1} parent=1 // pred_fallthru
      _
    // Predicated region
    $region18: #{tpu_custom_call.1} parent=1 // pred_check
      _
    $region19: #{tpu_custom_call.1} parent=1 // pred_check_branch
      %115 = sbr.rel (0) target = $region21
    $region20: #{tpu_custom_call.1} parent=1 // pred_region
      %116 = dma.done [#allocation4], 32
    $region21: #{tpu_custom_call.1} parent=1 // pred_fallthru
      _
    %117 = vsyncpa [#allocation4], 1

</llo_original>
